<compile_context>
chip_gen: v6e
topology: v6e:2x2x1
jax: 0.10.0
libtpu: 0.0.40
codegen_flags: <defaults>
</compile_context>

<pallas_src>
import math
from functools import partial

import jax
import jax.numpy as jnp
from jax import lax
from jax.experimental import pallas as pl
from jax.experimental.pallas import tpu as pltpu

# ---------------- small synthetic config ----------------
HIDDEN = 32
NUM_HEADS = 4
NUM_KV_HEADS = 2
HEAD_DIM = HIDDEN // NUM_HEADS            # 8
N_REP = NUM_HEADS // NUM_KV_HEADS         # 2
MROPE_SECTION = [2, 1, 1]                 # sums to HEAD_DIM // 2
ROPE_THETA = 1000000.0
BATCH = 2
SEQ = 8


# ---------------- tiled GEMM (+bias) kernel ----------------
def _matmul_bias_kernel(x_ref, w_ref, b_ref, o_ref, acc_ref):
    k = pl.program_id(2)

    @pl.when(k == 0)
    def _():
        acc_ref[...] = jnp.zeros_like(acc_ref)

    # w is already (in, out): MXU gets both operands directly, no transpose.
    acc_ref[...] += jnp.dot(x_ref[...], w_ref[...],
                            preferred_element_type=jnp.float32)

    @pl.when(k == pl.num_programs(2) - 1)
    def _():
        o_ref[...] = (acc_ref[...] + b_ref[...].astype(jnp.float32)
                      ).astype(o_ref.dtype)


def _tile(dim, target):
    if dim <= target:
        return dim
    if dim % target == 0:
        return target
    return dim  # fallback: full dim (toy-safe); real Qwen dims divide evenly


def linear(x2d, w_t, b, *, tm_target=256, tn_target=256, tk_target=512):
    """x2d: (M, K), w_t: (K, N) [pre-transposed], b: (N,) -> (M, N)."""
    M, K = x2d.shape
    K2, N = w_t.shape
    assert K == K2
    tm = _tile(M, tm_target)
    tn = _tile(N, tn_target)
    tk = _tile(K, tk_target)
    grid = (M // tm, N // tn, K // tk)
    return pl.pallas_call(
        _matmul_bias_kernel,
        out_shape=jax.ShapeDtypeStruct((M, N), x2d.dtype),
        grid=grid,
        in_specs=[
            pl.BlockSpec((tm, tk), lambda i, j, k: (i, k)),
            pl.BlockSpec((tk, tn), lambda i, j, k: (k, j)),
            pl.BlockSpec((1, tn), lambda i, j, k: (0, j)),
        ],
        out_specs=pl.BlockSpec((tm, tn), lambda i, j, k: (i, j)),
        scratch_shapes=[pltpu.VMEM((tm, tn), jnp.float32)],
        compiler_params=pltpu.CompilerParams(
            dimension_semantics=("parallel", "parallel", "arbitrary")),
    )(x2d, w_t, b.reshape(1, N))


# ---------------- attention kernel (all heads per batch step) ----------------
def _attn_kernel(q_ref, k_ref, v_ref, cos_ref, sins_ref, mask_ref, o_ref,
                 *, head_dim, n_rep, scale):
    q = q_ref[0].astype(jnp.float32)        # (S, H, D)
    k = k_ref[0].astype(jnp.float32)        # (S, KV, D)
    v = v_ref[0].astype(jnp.float32)        # (S, KV, D)
    cos = cos_ref[0].astype(jnp.float32)    # (S, D)
    sin_s = sins_ref[0].astype(jnp.float32)  # (S, D), sign already folded in
    mask = mask_ref[0, 0].astype(jnp.float32)  # (S, S)

    half = head_dim // 2
    num_heads = q.shape[1]
    num_kv = k.shape[1]

    def rope2d(x):  # x: (S, D)
        # rotate_half(x) * sin == roll(x, half) * (sign * sin); sign folded
        # into sin_s in the wrapper, roll goes through the XLU slot.
        return x * cos + pltpu.roll(x, shift=half, axis=1) * sin_s

    # RoPE K once per KV head (not per query head).
    k_rot = [rope2d(k[:, g, :]) for g in range(num_kv)]
    v_h = [v[:, g, :] for g in range(num_kv)]

    outs = []
    for h in range(num_heads):                      # static unroll (small H)
        g = h // n_rep                              # GQA group
        qh = rope2d(q[:, h, :])                     # (S, D)
        # q @ k^T without materializing a transpose: contract dim 1 of both.
        s = lax.dot_general(qh, k_rot[g], (((1,), (1,)), ((), ())),
                            preferred_element_type=jnp.float32)  # (S, S)
        s = s * scale + mask
        s = s - jnp.max(s, axis=-1, keepdims=True)
        p = jnp.exp(s)
        denom = jnp.sum(p, axis=-1, keepdims=True)
        p = p * pl.reciprocal(denom, approx=True)   # EUP slot
        outs.append(jnp.dot(p, v_h[g], preferred_element_type=jnp.float32))

    # Assemble (S, H*D) directly — output already in (B, S, H*D) layout.
    o_ref[0] = jnp.concatenate(outs, axis=-1).astype(o_ref.dtype)


def attention(q, k, v, cos, sin_signed, mask):
    """q: (B,S,H,D), k/v: (B,S,KV,D), cos/sin: (B,S,D), mask: (B,1,S,S)
    -> (B, S, H*D)."""
    B, S, H, D = q.shape
    KV = k.shape[2]
    kernel = partial(_attn_kernel, head_dim=D, n_rep=H // KV,
                     scale=1.0 / math.sqrt(D))
    return pl.pallas_call(
        kernel,
        out_shape=jax.ShapeDtypeStruct((B, S, H * D), q.dtype),
        grid=(B,),
        in_specs=[
            pl.BlockSpec((1, S, H, D), lambda b: (b, 0, 0, 0)),
            pl.BlockSpec((1, S, KV, D), lambda b: (b, 0, 0, 0)),
            pl.BlockSpec((1, S, KV, D), lambda b: (b, 0, 0, 0)),
            pl.BlockSpec((1, S, D), lambda b: (b, 0, 0)),
            pl.BlockSpec((1, S, D), lambda b: (b, 0, 0)),
            pl.BlockSpec((1, 1, S, S), lambda b: (b, 0, 0, 0)),
        ],
        out_specs=pl.BlockSpec((1, S, H * D), lambda b: (b, 0, 0)),
        compiler_params=pltpu.CompilerParams(
            dimension_semantics=("parallel",)),
    )(q, k, v, cos, sin_signed, mask)


# ---------------- rotary glue (plain JAX) ----------------
def rotary_cos_sin(position_ids, head_dim, theta=ROPE_THETA, dtype=jnp.float32):
    """position_ids: (3, B, S) -> cos, sin of shape (3, B, S, head_dim)."""
    inv_freq = 1.0 / (theta ** (jnp.arange(0, head_dim, 2, dtype=jnp.float32) / head_dim))
    freqs = inv_freq[None, None, :, None] * position_ids[:, :, None, :].astype(jnp.float32)
    freqs = jnp.swapaxes(freqs, 2, 3)                       # (3, B, S, D/2)
    emb = jnp.concatenate([freqs, freqs], axis=-1)          # (3, B, S, D)
    return jnp.cos(emb).astype(dtype), jnp.sin(emb).astype(dtype)


def mrope_merge(x, mrope_section):
    """x: (3, B, S, D) -> (B, S, D), section i taken from axis-0 index i % 3."""
    sections = mrope_section * 2
    chunks, start = [], 0
    for i, m in enumerate(sections):
        chunks.append(x[i % 3, :, :, start:start + m])
        start += m
    return jnp.concatenate(chunks, axis=-1)


# ---------------- parameter prep (done once) ----------------
def prepare_params(params):
    """Fuse q/k/v weights and pre-transpose all weights to (in, out)."""
    return {
        "wqkv_t": jnp.concatenate(
            [params["wq"], params["wk"], params["wv"]], axis=0).T,
        "bqkv": jnp.concatenate(
            [params["bq"], params["bk"], params["bv"]], axis=0),
        "wo_t": params["wo"].T,
        "bo": params["bo"],
    }


# ---------------- full forward ----------------
def qwen_attention_forward(prep, hidden_states, attention_mask, position_ids):
    B, S, Hdim = hidden_states.shape
    x2d = hidden_states.reshape(B * S, Hdim)

    dq = NUM_HEADS * HEAD_DIM
    dkv = NUM_KV_HEADS * HEAD_DIM

    # One fused, lane-dense QKV GEMM.
    qkv = linear(x2d, prep["wqkv_t"], prep["bqkv"])          # (B*S, dq+2*dkv)
    q = qkv[:, :dq].reshape(B, S, NUM_HEADS, HEAD_DIM)
    k = qkv[:, dq:dq + dkv].reshape(B, S, NUM_KV_HEADS, HEAD_DIM)
    v = qkv[:, dq + dkv:].reshape(B, S, NUM_KV_HEADS, HEAD_DIM)

    cos3, sin3 = rotary_cos_sin(position_ids, HEAD_DIM, dtype=hidden_states.dtype)
    cos = mrope_merge(cos3, MROPE_SECTION)                   # (B, S, D)
    sin = mrope_merge(sin3, MROPE_SECTION)
    half = HEAD_DIM // 2
    sign = jnp.concatenate([-jnp.ones((half,), sin.dtype),
                            jnp.ones((half,), sin.dtype)])
    sin_signed = sin * sign                                  # fold rotate_half sign

    attn = attention(q, k, v, cos, sin_signed, attention_mask)   # (B, S, H*D)
    out = linear(attn.reshape(B * S, dq), prep["wo_t"], prep["bo"])
    return out.reshape(B, S, HIDDEN)


# ---------------- pure-JAX reference for sanity ----------------
def reference_forward(params, hidden_states, attention_mask, position_ids):
    B, S, Hdim = hidden_states.shape
    q = hidden_states @ params["wq"].T + params["bq"]
    k = hidden_states @ params["wk"].T + params["bk"]
    v = hidden_states @ params["wv"].T + params["bv"]
    q = q.reshape(B, S, NUM_HEADS, HEAD_DIM).transpose(0, 2, 1, 3)
    k = k.reshape(B, S, NUM_KV_HEADS, HEAD_DIM).transpose(0, 2, 1, 3)
    v = v.reshape(B, S, NUM_KV_HEADS, HEAD_DIM).transpose(0, 2, 1, 3)

    cos3, sin3 = rotary_cos_sin(position_ids, HEAD_DIM, dtype=hidden_states.dtype)
    cos = mrope_merge(cos3, MROPE_SECTION)[:, None, :, :]
    sin = mrope_merge(sin3, MROPE_SECTION)[:, None, :, :]

    def rot_half(x):
        h = x.shape[-1] // 2
        return jnp.concatenate([-x[..., h:], x[..., :h]], axis=-1)

    q = q * cos + rot_half(q) * sin
    k = k * cos + rot_half(k) * sin
    k = jnp.repeat(k, N_REP, axis=1)
    v = jnp.repeat(v, N_REP, axis=1)

    scores = jnp.einsum("bhqd,bhkd->bhqk", q, k) / math.sqrt(HEAD_DIM)
    scores = scores + attention_mask
    p = jax.nn.softmax(scores.astype(jnp.float32), axis=-1).astype(q.dtype)
    attn = jnp.einsum("bhqk,bhkd->bhqd", p, v)
    attn = attn.transpose(0, 2, 1, 3).reshape(B, S, NUM_HEADS * HEAD_DIM)
    return attn @ params["wo"].T + params["bo"]


# ---------------- main ----------------
if __name__ == "__main__":
    key = jax.random.PRNGKey(0)
    ks = jax.random.split(key, 8)

    params = {
        "wq": 0.1 * jax.random.normal(ks[0], (NUM_HEADS * HEAD_DIM, HIDDEN), jnp.float32),
        "bq": 0.1 * jax.random.normal(ks[1], (NUM_HEADS * HEAD_DIM,), jnp.float32),
        "wk": 0.1 * jax.random.normal(ks[2], (NUM_KV_HEADS * HEAD_DIM, HIDDEN), jnp.float32),
        "bk": 0.1 * jax.random.normal(ks[3], (NUM_KV_HEADS * HEAD_DIM,), jnp.float32),
        "wv": 0.1 * jax.random.normal(ks[4], (NUM_KV_HEADS * HEAD_DIM, HIDDEN), jnp.float32),
        "bv": 0.1 * jax.random.normal(ks[5], (NUM_KV_HEADS * HEAD_DIM,), jnp.float32),
        "wo": 0.1 * jax.random.normal(ks[6], (HIDDEN, NUM_HEADS * HEAD_DIM), jnp.float32),
        "bo": jnp.zeros((HIDDEN,), jnp.float32),   # o_proj has no bias
    }
    prep = prepare_params(params)

    hidden_states = jax.random.normal(ks[7], (BATCH, SEQ, HIDDEN), jnp.float32)

    # 3D mrope position ids (temporal / height / width) — identical for text.
    pos = jnp.arange(SEQ, dtype=jnp.int32)[None, :].repeat(BATCH, axis=0)  # (B, S)
    position_ids = jnp.stack([pos, pos, pos], axis=0)                      # (3, B, S)

    # Additive causal mask (B, 1, S, S).
    i = jnp.arange(SEQ)[:, None]
    j = jnp.arange(SEQ)[None, :]
    causal = jnp.where(j <= i, 0.0, -1e9).astype(jnp.float32)
    attention_mask = jnp.broadcast_to(causal, (BATCH, 1, SEQ, SEQ))

    out = qwen_attention_forward(prep, hidden_states, attention_mask, position_ids)
    out = jax.block_until_ready(out)

    ref = reference_forward(params, hidden_states, attention_mask, position_ids)
    assert out.shape == (BATCH, SEQ, HIDDEN)
    # tolerance slightly relaxed: softmax denom uses EUP approx reciprocal
    assert jnp.allclose(out, ref, rtol=2e-3, atol=2e-3), "mismatch vs reference"

    print("KERNEL_OK")
</pallas_src>

<mosaic_0001>
module attributes {stable_mosaic.version = 11 : i64} {
  func.func @_matmul_bias_kernel(%arg0: i32, %arg1: i32, %arg2: i32, %arg3: memref<16x32xf32, #tpu.memory_space<vmem>>, %arg4: memref<32x64xf32, #tpu.memory_space<vmem>>, %arg5: memref<1x64xf32, #tpu.memory_space<vmem>>, %arg6: memref<16x64xf32, #tpu.memory_space<vmem>>, %arg7: memref<16x64xf32, #tpu.memory_space<vmem>>) attributes {dimension_semantics = [#tpu.dimension_semantics<parallel>, #tpu.dimension_semantics<parallel>, #tpu.dimension_semantics<arbitrary>], iteration_bounds = array<i64: 1, 1, 1>, scalar_prefetch = 0 : i64, scratch_operands = 1 : i64, tpu.core_type = #tpu.core_type<tc>, window_params = [{transform_indices = @transform_0, window_bounds = array<i64: 16, 32>}, {transform_indices = @transform_1, window_bounds = array<i64: 32, 64>}, {transform_indices = @transform_2, window_bounds = array<i64: 1, 64>}, {transform_indices = @transform_3, window_bounds = array<i64: 16, 64>}]} {
    %c0_i32 = arith.constant 0 : i32
    %0 = arith.cmpi eq, %arg2, %c0_i32 : i32
    %1 = arith.extui %0 : i1 to i32
    %c0_i32_0 = arith.constant 0 : i32
    %2 = arith.cmpi ne, %1, %c0_i32_0 : i32
    scf.if %2 {
      %cst_10 = arith.constant 0.000000e+00 : f32
      %12 = vector.broadcast %cst_10 : f32 to vector<16x64xf32>
      %c0_11 = arith.constant 0 : index
      %c0_12 = arith.constant 0 : index
      %13 = vector.load %arg7[%c0_11, %c0_12] : memref<16x64xf32, #tpu.memory_space<vmem>>, vector<16x64xf32>
      tpu.vector_store %arg7[%c0_11, %c0_12], %12 {strides = array<i32>} : memref<16x64xf32, #tpu.memory_space<vmem>>, vector<16x64xf32>,
    } else {
    }
    %c0 = arith.constant 0 : index
    %c0_1 = arith.constant 0 : index
    %3 = vector.load %arg7[%c0, %c0_1] : memref<16x64xf32, #tpu.memory_space<vmem>>, vector<16x64xf32>
    %c0_2 = arith.constant 0 : index
    %c0_3 = arith.constant 0 : index
    %4 = vector.load %arg3[%c0_2, %c0_3] : memref<16x32xf32, #tpu.memory_space<vmem>>, vector<16x32xf32>
    %c0_4 = arith.constant 0 : index
    %c0_5 = arith.constant 0 : index
    %5 = vector.load %arg4[%c0_4, %c0_5] : memref<32x64xf32, #tpu.memory_space<vmem>>, vector<32x64xf32>
    %cst = arith.constant dense<0.000000e+00> : vector<16x64xf32>
    %6 = tpu.matmul %4, %5, %cst {dimension_numbers = #tpu.dot_dimension_numbers<[1], [0], [0], [1], [0, 0, 1, 1], [], []>} : vector<16x32xf32>, vector<32x64xf32>, vector<16x64xf32> -> vector<16x64xf32>
    %7 = arith.addf %3, %6 : vector<16x64xf32>
    %c0_6 = arith.constant 0 : index
    %c0_7 = arith.constant 0 : index
    %8 = vector.load %arg7[%c0_6, %c0_7] : memref<16x64xf32, #tpu.memory_space<vmem>>, vector<16x64xf32>
    tpu.vector_store %arg7[%c0_6, %c0_7], %7 {strides = array<i32>} : memref<16x64xf32, #tpu.memory_space<vmem>>, vector<16x64xf32>,
    %c0_i32_8 = arith.constant 0 : i32
    %9 = arith.cmpi eq, %arg2, %c0_i32_8 : i32
    %10 = arith.extui %9 : i1 to i32
    %c0_i32_9 = arith.constant 0 : i32
    %11 = arith.cmpi ne, %10, %c0_i32_9 : i32
    scf.if %11 {
      %c0_10 = arith.constant 0 : index
      %c0_11 = arith.constant 0 : index
      %12 = vector.load %arg7[%c0_10, %c0_11] : memref<16x64xf32, #tpu.memory_space<vmem>>, vector<16x64xf32>
      %c0_12 = arith.constant 0 : index
      %c0_13 = arith.constant 0 : index
      %13 = vector.load %arg5[%c0_12, %c0_13] : memref<1x64xf32, #tpu.memory_space<vmem>>, vector<1x64xf32>
      %14 = vector.broadcast %13 : vector<1x64xf32> to vector<16x64xf32>
      %15 = arith.addf %12, %14 : vector<16x64xf32>
      %c0_14 = arith.constant 0 : index
      %c0_15 = arith.constant 0 : index
      %16 = vector.load %arg6[%c0_14, %c0_15] : memref<16x64xf32, #tpu.memory_space<vmem>>, vector<16x64xf32>
      tpu.vector_store %arg6[%c0_14, %c0_15], %15 {strides = array<i32>} : memref<16x64xf32, #tpu.memory_space<vmem>>, vector<16x64xf32>,
    } else {
    }
    return
  }
  func.func @transform_0(%arg0: i32, %arg1: i32, %arg2: i32) -> (i32, i32) {
    %c0_i32 = arith.constant 0 : i32
    return %arg0, %arg2 : i32, i32
  }
  func.func @transform_1(%arg0: i32, %arg1: i32, %arg2: i32) -> (i32, i32) {
    %c0_i32 = arith.constant 0 : i32
    return %arg2, %arg1 : i32, i32
  }
  func.func @transform_2(%arg0: i32, %arg1: i32, %arg2: i32) -> (i32, i32) {
    %c0_i32 = arith.constant 0 : i32
    %c0_i32_0 = arith.constant 0 : i32
    return %c0_i32, %arg1 : i32, i32
  }
  func.func @transform_3(%arg0: i32, %arg1: i32, %arg2: i32) -> (i32, i32) {
    %c0_i32 = arith.constant 0 : i32
    return %arg0, %arg1 : i32, i32
  }
}

</mosaic_0001>

<llo_original>
// kernel: tpu_custom_call.1
$region0: #{tpu_custom_call.1}
  #allocation0 [shape = 'u32[]', space=smem, size = 0x4, offset = 0x4, fixed_abs, tag = 'smem constant byte address 0x4 - core index']
  #allocation1 [shape = 'u32[144,128]{1,0:T(1,128)}', space=vmem, size = 0x12000, scoped, tag = 'internal scratch']
  #allocation2 [shape = 'f32[16,64]{1,0:T(8,128)}', space=vmem, size = 0x2000, scoped, tag = 'scratch operand']
  %s0 = inlined_call_operand.hbm [shape: f32[16,32], index: 0, kind: input, shape index: {}]
  %s1 = inlined_call_operand.hbm [shape: f32[32,64], index: 1, kind: input, shape index: {}]
  %s2 = inlined_call_operand.vmem [shape: f32[1,64], index: 2, kind: input, shape index: {}]
  %s3 = inlined_call_operand.hbm [shape: f32[16,64], index: 3, kind: output, shape index: {}]
  %s4 = sld [smem:[#allocation0]]
  $region38: #{tpu_custom_call.1} parent=0
    _
  %s6 = ssub.s32 1, %s4
  %s7 = scalar_select 0, %s6, %s4
  $region1: #{tpu_custom_call.1} parent=0
    #allocation3 [shape = 'u8[8192]{0}', space=vmem, size = 0x2000, scoped, tag = 'input window, operand 0, single buffered']
    #allocation4 [shape = 's32[1]{0}', space=sflag, size = 0x4, scoped, tag = 'scoped memory for tpu_custom_call.1']
    #allocation5 [shape = 's32[1]{0}', space=sflag, size = 0x4, scoped, tag = 'scoped memory for tpu_custom_call.1']
    #allocation6 [shape = 'u8[16384]{0}', space=vmem, size = 0x4000, scoped, tag = 'input window, operand 1, single buffered']
    #allocation7 [shape = 's32[1]{0}', space=sflag, size = 0x4, scoped, tag = 'scoped memory for tpu_custom_call.1']
    #allocation8 [shape = 'u8[8192]{0}', space=vmem, size = 0x2000, scoped, tag = 'output window, operand 0, single buffered']
    %8 = vsyncpa [#allocation4], 0
    %9 = vsyncpa [#allocation7], 0
    %10 = vsyncpa [#allocation5], 0
    // Predicated region
    $region2: #{tpu_custom_call.1} parent=1 // pred_check
      _
    $region3: #{tpu_custom_call.1} parent=1 // pred_check_branch
      %12 = sbr.rel (0) target = $region5
    $region4: #{tpu_custom_call.1} parent=1 // pred_region
      %s14 = ssub.s32 256, 256
      %15 = vsyncadd [#allocation4], %s14
      %s16 = sshll.u32 [#allocation3], 4
      %s17 = int_to_ptr.vmem [resolvable:$true] %s16
      %22 = dma.hbm_to_vmem [thread:$0]  %s0, 256, %s17, [#allocation4], 128, 128, 8
    $region5: #{tpu_custom_call.1} parent=1 // pred_fallthru
      _
    // Predicated region
    $region6: #{tpu_custom_call.1} parent=1 // pred_check
      _
    $region7: #{tpu_custom_call.1} parent=1 // pred_check_branch
      %24 = sbr.rel (0) target = $region9
    $region8: #{tpu_custom_call.1} parent=1 // pred_region
      %s26 = ssub.s32 512, 512
      %27 = vsyncadd [#allocation7], %s26
      %s28 = sshll.u32 [#allocation6], 4
      %s29 = int_to_ptr.vmem [resolvable:$true] %s28
      %34 = dma.hbm_to_vmem [thread:$0]  %s1, 512, %s29, [#allocation7], 128, 128, 8
    $region9: #{tpu_custom_call.1} parent=1 // pred_fallthru
      _
    // Predicated region
    $region10: #{tpu_custom_call.1} parent=1 // pred_check
      _
    $region11: #{tpu_custom_call.1} parent=1 // pred_check_branch
      %36 = sbr.rel (0) target = $region13
    $region12: #{tpu_custom_call.1} parent=1 // pred_region
      _
    $region13: #{tpu_custom_call.1} parent=1 // pred_fallthru
      _
    // Predicated region
    $region14: #{tpu_custom_call.1} parent=1 // pred_check
      _
    $region15: #{tpu_custom_call.1} parent=1 // pred_check_branch
      %38 = sbr.rel (0) target = $region17
    $region16: #{tpu_custom_call.1} parent=1 // pred_region
      %39 = dma.done [#allocation4], 256
    $region17: #{tpu_custom_call.1} parent=1 // pred_fallthru
      _
    // Predicated region
    $region18: #{tpu_custom_call.1} parent=1 // pred_check
      _
    $region19: #{tpu_custom_call.1} parent=1 // pred_check_branch
      %41 = sbr.rel (0) target = $region21
    $region20: #{tpu_custom_call.1} parent=1 // pred_region
      %42 = dma.done [#allocation7], 512
    $region21: #{tpu_custom_call.1} parent=1 // pred_fallthru
      _
    %p43 = scmp.eq.s32.totalorder 0, 0
    // Predicated region
    $region22: #{tpu_custom_call.1} parent=1 // pred_check
      %p44 = pneg %p43
    $region23: #{tpu_custom_call.1} parent=1 // pred_check_branch
      %46 = sbr.rel (%p44) target = $region25
    $region24: #{tpu_custom_call.1} parent=1 // pred_region
      %vm47 = vcmask 523264
      %48 = vst.msk [vmem:[#allocation2] sm:$0xff] %vm47, 0.0
      %49 = vst.msk [vmem:[#allocation2 + $0x8] sm:$0xff] %vm47, 0.0
    $region25: #{tpu_custom_call.1} parent=1 // pred_fallthru
      _
    %v50 = vld [vmem:[#allocation2] sm:$0xff]
    %v51 = vld [vmem:[#allocation2 + $0x8] sm:$0xff]
    %v52 = vld [vmem:[#allocation3] sm:$0xff]
    %v53 = vld [vmem:[#allocation3 + $0x8] sm:$0xff]
    %v54 = vld [vmem:[#allocation6] sm:$0xff]
    %v55 = vld [vmem:[#allocation6 + $0x8] sm:$0xff]
    %v56 = vld [vmem:[#allocation6 + $0x10] sm:$0xff]
    %v57 = vld [vmem:[#allocation6 + $0x18] sm:$0xff]
    %vm58 = vcmask 261120
    %v60 = vsel %vm58, %v52, 0
    %v63 = vsel %vm58, %v53, 0
    %65 = vmatprep.subr.mxu0 0.0
    %66 = vmatpush1.msra.mxu0 0.0
    %67 = vmatprep.subr.mxu0 0.0
    %68 = vmatpush1.msra.mxu0 0.0
    %69 = vmatprep.subr.mxu0 0.0
    %70 = vmatpush1.msra.mxu0 0.0
    %71 = vmatprep.subr.mxu0 0.0
    %72 = vmatpush1.msra.mxu0 0.0
    %73 = vmatprep.subr.mxu0 0.0
    %74 = vmatpush1.msra.mxu0 0.0
    %75 = vmatprep.subr.mxu0 0.0
    %76 = vmatpush1.msra.mxu0 0.0
    %77 = vmatprep.subr.mxu0 0.0
    %78 = vmatpush1.msra.mxu0 0.0
    %79 = vmatprep.subr.mxu0 0.0
    %80 = vmatpush1.msra.mxu0 0.0
    %81 = vmatprep.subr.mxu0 0.0
    %82 = vmatpush1.msra.mxu0 0.0
    %83 = vmatprep.subr.mxu0 0.0
    %84 = vmatpush1.msra.mxu0 0.0
    %85 = vmatprep.subr.mxu0 0.0
    %86 = vmatpush1.msra.mxu0 0.0
    %87 = vmatprep.subr.mxu0 0.0
    %88 = vmatpush1.msra.mxu0 0.0
    %89 = vmatprep.subr.mxu0 0.0
    %90 = vmatpush1.msra.mxu0 %v57
    %91 = vmatprep.subr.mxu0 0.0
    %92 = vmatpush1.msra.mxu0 %v56
    %93 = vmatprep.subr.mxu0 0.0
    %94 = vmatpush1.msra.mxu0 %v55
    %95 = vmatprep.subr.mxu0 0.0
    %96 = vmatpush1.msra.mxu0 %v54
    %97 = vmatprep.subr.mxu0 0.0
    %98 = vmatpush2.msra.mxu0 0.0
    %99 = vmatprep.subr.mxu0 0.0
    %100 = vmatpush2.msra.mxu0 0.0
    %101 = vmatprep.subr.mxu0 0.0
    %102 = vmatpush2.msra.mxu0 0.0
    %103 = vmatprep.subr.mxu0 0.0
    %104 = vmatpush2.msra.mxu0 0.0
    %105 = vmatprep.subr.mxu0 0.0
    %106 = vmatpush2.msra.mxu0 0.0
    %107 = vmatprep.subr.mxu0 0.0
    %108 = vmatpush2.msra.mxu0 0.0
    %109 = vmatprep.subr.mxu0 0.0
    %110 = vmatpush2.msra.mxu0 0.0
    %111 = vmatprep.subr.mxu0 0.0
    %112 = vmatpush2.msra.mxu0 0.0
    %113 = vmatprep.subr.mxu0 0.0
    %114 = vmatpush2.msra.mxu0 0.0
    %115 = vmatprep.subr.mxu0 0.0
    %116 = vmatpush2.msra.mxu0 0.0
    %117 = vmatprep.subr.mxu0 0.0
    %118 = vmatpush2.msra.mxu0 0.0
    %119 = vmatprep.subr.mxu0 0.0
    %120 = vmatpush2.msra.mxu0 0.0
    %121 = vmatprep.subr.mxu0 0.0
    %122 = vmatpush2.msra.mxu0 0.0
    %123 = vmatprep.subr.mxu0 0.0
    %124 = vmatpush2.msra.mxu0 0.0
    %125 = vmatprep.subr.mxu0 0.0
    %126 = vmatpush2.msra.mxu0 0.0
    %127 = vmatprep.subr.mxu0 0.0
    %128 = vmatpush2.msra.mxu0 0.0
    %129 = vmatprep.mubr.f32.mxu0 0.0
    %130 = vmatmul.mubr.f32.gmra.mxu0 %v60
    %v131 = vpop.f32.mrf.mxu0
    %v132 = vadd.f32 0.0, %v131
    %v133 = vpop.f32.mrf.mxu0
    %134 = vmatprep.mubr.f32.mxu0 0.0
    %135 = vmatmul.mubr.f32.gmra.mxu0 %v63
    %v136 = vpop.f32.mrf.mxu0
    %v137 = vadd.f32 0.0, %v136
    %v138 = vpop.f32.mrf.mxu0
    %139 = vdwg.mxu0
    %v140 = vadd.f32 %v50, %v132
    %v141 = vadd.f32 %v51, %v137
    %vm142 = vcmask 523264
    %143 = vst.msk [vmem:[#allocation2] sm:$0xff] %vm142, %v140
    %144 = vst.msk [vmem:[#allocation2 + $0x8] sm:$0xff] %vm142, %v141
    // Predicated region
    $region26: #{tpu_custom_call.1} parent=1 // pred_check
      %p145 = pneg %p43
    $region27: #{tpu_custom_call.1} parent=1 // pred_check_branch
      %147 = sbr.rel (%p145) target = $region29
    $region28: #{tpu_custom_call.1} parent=1 // pred_region
      %v148 = vld [vmem:[#allocation2] sm:$0xff]
      %v149 = vld [vmem:[#allocation2 + $0x8] sm:$0xff]
      %v150 = vld [vmem:[%s2] sm:$0x1]
      %v152 = vlaneseq
      %v153 = vshrl.u32 %v152, 7
      %v154 = vsub.s32 0, %v153
      %v155 = vrot.slane %v150, %v154
      %v157 = vadd.f32 %v148, %v155
      %v158 = vadd.f32 %v149, %v155
      %159 = vst.msk [vmem:[#allocation8] sm:$0xff] %vm142, %v157
      %160 = vst.msk [vmem:[#allocation8 + $0x8] sm:$0xff] %vm142, %v158
    $region29: #{tpu_custom_call.1} parent=1 // pred_fallthru
      _
    // Predicated region
    $region30: #{tpu_custom_call.1} parent=1 // pred_check
      _
    $region31: #{tpu_custom_call.1} parent=1 // pred_check_branch
      %162 = sbr.rel (0) target = $region33
    $region32: #{tpu_custom_call.1} parent=1 // pred_region
      %s164 = ssub.s32 256, 256
      %165 = vsyncadd [#allocation5], %s164
      %s166 = sshll.u32 [#allocation8], 4
      %s167 = int_to_ptr.vmem [resolvable:$true] %s166
      %172 = dma.vmem_to_hbm [thread:$0]  %s167, 256, %s3, [#allocation5], 128, 128, 8
    $region33: #{tpu_custom_call.1} parent=1 // pred_fallthru
      _
    // Predicated region
    $region34: #{tpu_custom_call.1} parent=1 // pred_check
      _
    $region35: #{tpu_custom_call.1} parent=1 // pred_check_branch
      %174 = sbr.rel (0) target = $region37
    $region36: #{tpu_custom_call.1} parent=1 // pred_region
      %175 = dma.done [#allocation5], 256
    $region37: #{tpu_custom_call.1} parent=1 // pred_fallthru
      _
    %176 = vsyncpa [#allocation4], 1
    %177 = vsyncpa [#allocation7], 1
    %178 = vsyncpa [#allocation5], 1

</llo_original>
